<compile_context>
chip_gen: v6e
topology: v6e:2x2x1
jax: 0.10.0
libtpu: 0.0.40
codegen_flags: <defaults>
</compile_context>

<pallas_src>
import jax
import jax.numpy as jnp
from jax.experimental import pallas as pl
from jax.experimental.pallas import tpu as pltpu

D_IN = 40    # nn.Linear in_features
D_OUT = 30   # nn.Linear out_features

# Largest batch tile streamed per grid step (batch lives on the lane axis, so
# tiles are multiples of 128).  Double-buffered f32 footprint at 8192 is
# ~4.5 MiB (see accounting above); raising this buys <6% (per-step overhead
# ~0.35 us vs multi-us DMA) so it is intentionally left modest.
TILE_B_MAX = 8192


def _linear_relu_fm_kernel(x_ref, w_ref, b_ref, o_ref):
    # MXU matmul with f32 accumulate; bias add + ReLU on the VPU (fully hidden
    # under the HBM stream).
    #   x_ref: (D_IN, tile_b)   w_ref: (D_OUT, D_IN)   b_ref: (D_OUT, 1)
    y = jnp.dot(w_ref[...], x_ref[...], preferred_element_type=jnp.float32)
    y = y + b_ref[...]                       # (D_OUT, 1) broadcasts across lanes
    o_ref[...] = jnp.maximum(y, 0.0).astype(o_ref.dtype)


def _choose_tile_b(batch):
    """Pick a lane-axis batch tile: >=4 grid steps when possible, multiple of 128."""
    t = min(TILE_B_MAX, pl.cdiv(batch, 4))
    t = ((t + 127) // 128) * 128
    if t >= batch:
        return batch         # single full block (covers tiny batches like B=2)
    return t


def my_sequential_pallas(x_fm, w, b, *, tile_b=None, out_dtype=None):
    """relu(x @ W^T + b) in feature-major layout.

    x_fm: (40, B)  -- x transposed (batch on the minor/lane axis)
    w:    (30, 40) -- PyTorch nn.Linear weight layout (out_features, in_features)
    b:    (30,)
    returns y_fm: (30, B)  == relu(x @ W^T + b)^T
    """
    d_in, batch = x_fm.shape
    d_out = w.shape[0]
    if out_dtype is None:
        out_dtype = x_fm.dtype
    b2 = b.reshape(d_out, 1)

    if tile_b is None:
        tile_b = _choose_tile_b(batch)
    tile_b = min(tile_b, batch)
    if tile_b < batch:
        tile_b = ((tile_b + 127) // 128) * 128    # lane-axis tiles: 128-aligned
    grid = (pl.cdiv(batch, tile_b),)

    itemsize = jnp.dtype(x_fm.dtype).itemsize
    cost = pl.CostEstimate(
        flops=2 * batch * d_in * d_out,
        transcendentals=0,
        # lane-dense layout: bytes are essentially the useful bytes
        bytes_accessed=(itemsize * batch * d_in                 # x stream
                        + jnp.dtype(out_dtype).itemsize * batch * d_out  # y stream
                        + 4 * (d_out * d_in + d_out)),          # resident W, b
    )

    return pl.pallas_call(
        _linear_relu_fm_kernel,
        out_shape=jax.ShapeDtypeStruct((d_out, batch), out_dtype),
        grid=grid,
        in_specs=[
            # x streams one lane-dense batch tile per grid step; auto
            # double-buffered so the DMA of tile i+1 overlaps compute on tile i.
            pl.BlockSpec((d_in, tile_b), lambda i: (0, i)),
            # W and b: constant block index -> fetched once, resident in VMEM.
            pl.BlockSpec((d_out, d_in), lambda i: (0, 0)),
            pl.BlockSpec((d_out, 1), lambda i: (0, 0)),
        ],
        out_specs=pl.BlockSpec((d_out, tile_b), lambda i: (0, i)),
        compiler_params=pltpu.CompilerParams(
            # Batch tiles are independent: "parallel" lets v7x's two
            # TensorCores split the grid; harmless on single-TC v5e/v6e.
            dimension_semantics=("parallel",),
            # Headroom only; real double-buffered footprint is ~4.5 MiB at
            # tile_b=8192 (fits every generation's scoped default).
            vmem_limit_bytes=32 * 1024 * 1024,
        ),
        cost_estimate=cost,
    )(x_fm, w, b2)


def my_sequential(x_fm, w, b):
    """Dispatcher: tiny batches (~KFLOPs of work) let XLA fuse; larger batches
    take the lane-dense, batch-tiled Pallas kernel."""
    if x_fm.shape[1] < 1024:
        return jnp.maximum(jnp.dot(w, x_fm) + b[:, None], 0.0)
    return my_sequential_pallas(x_fm, w, b)


def init_params(key, d_in=D_IN, d_out=D_OUT):
    # Mimics PyTorch nn.Linear default init: U(-1/sqrt(d_in), +1/sqrt(d_in)).
    # W stays in PyTorch's (out_features, in_features) layout.
    kw, kb = jax.random.split(key)
    bound = 1.0 / jnp.sqrt(jnp.float32(d_in))
    w = jax.random.uniform(kw, (d_out, d_in), jnp.float32, -bound, bound)
    b = jax.random.uniform(kb, (d_out,), jnp.float32, -bound, bound)
    return w, b


if __name__ == "__main__":
    key = jax.random.PRNGKey(0)
    kx1, kx2, kp = jax.random.split(key, 3)
    w, b = init_params(kp)

    # 1) Module-spec shape: batch=2, features=40, handed over feature-major
    #    as (40, 2).  Single full block, grid=(1,).
    x_small_fm = jax.random.uniform(kx1, (D_IN, 2), jnp.float32)
    out_small = jax.block_until_ready(my_sequential_pallas(x_small_fm, w, b))
    ref_small = jnp.maximum(jnp.dot(w, x_small_fm) + b[:, None], 0.0)
    assert out_small.shape == (D_OUT, 2)
    assert jnp.allclose(out_small, ref_small, atol=1e-5, rtol=1e-5)

    # 2) Exercise the lane-dense batch-tiled pipeline, including a partial
    #    final tile: B=4224 -> auto tile_b=1152, grid=(4,), last tile 768 rows.
    x_big_fm = jax.random.uniform(kx2, (D_IN, 4224), jnp.float32)
    out_big = jax.block_until_ready(my_sequential_pallas(x_big_fm, w, b))
    ref_big = jnp.maximum(jnp.dot(w, x_big_fm) + b[:, None], 0.0)
    assert out_big.shape == (D_OUT, 4224)
    assert jnp.allclose(out_big, ref_big, atol=1e-5, rtol=1e-5)

    print("KERNEL_OK")
</pallas_src>

<mosaic_0001>
module attributes {stable_mosaic.version = 11 : i64} {
  func.func @_linear_relu_fm_kernel(%arg0: i32, %arg1: memref<40x2xf32, #tpu.memory_space<vmem>>, %arg2: memref<30x40xf32, #tpu.memory_space<vmem>>, %arg3: memref<30x1xf32, #tpu.memory_space<vmem>>, %arg4: memref<30x2xf32, #tpu.memory_space<vmem>>) attributes {dimension_semantics = [#tpu.dimension_semantics<parallel>], iteration_bounds = array<i64: 1>, scalar_prefetch = 0 : i64, scratch_operands = 0 : i64, tpu.core_type = #tpu.core_type<tc>, window_params = [{transform_indices = @transform_0, window_bounds = array<i64: 40, 2>}, {pipeline_mode = #tpu.pipeline_mode<synchronous>, transform_indices = @transform_1, window_bounds = array<i64: 30, 40>}, {pipeline_mode = #tpu.pipeline_mode<synchronous>, transform_indices = @transform_2, window_bounds = array<i64: 30, 1>}, {transform_indices = @transform_3, window_bounds = array<i64: 30, 2>}]} {
    %c0 = arith.constant 0 : index
    %c0_0 = arith.constant 0 : index
    %0 = vector.load %arg2[%c0, %c0_0] : memref<30x40xf32, #tpu.memory_space<vmem>>, vector<30x40xf32>
    %c0_1 = arith.constant 0 : index
    %c0_2 = arith.constant 0 : index
    %1 = vector.load %arg1[%c0_1, %c0_2] : memref<40x2xf32, #tpu.memory_space<vmem>>, vector<40x2xf32>
    %cst = arith.constant dense<0.000000e+00> : vector<30x2xf32>
    %2 = tpu.matmul %0, %1, %cst {dimension_numbers = #tpu.dot_dimension_numbers<[1], [0], [0], [1], [0, 0, 1, 1], [], []>} : vector<30x40xf32>, vector<40x2xf32>, vector<30x2xf32> -> vector<30x2xf32>
    %c0_3 = arith.constant 0 : index
    %c0_4 = arith.constant 0 : index
    %3 = vector.load %arg3[%c0_3, %c0_4] : memref<30x1xf32, #tpu.memory_space<vmem>>, vector<30x1xf32>
    %4 = vector.broadcast %3 : vector<30x1xf32> to vector<30x2xf32>
    %5 = arith.addf %2, %4 : vector<30x2xf32>
    %cst_5 = arith.constant 0.000000e+00 : f32
    %6 = vector.broadcast %cst_5 : f32 to vector<30x2xf32>
    %7 = arith.maximumf %5, %6 : vector<30x2xf32>
    %c0_6 = arith.constant 0 : index
    %c0_7 = arith.constant 0 : index
    %8 = vector.load %arg4[%c0_6, %c0_7] : memref<30x2xf32, #tpu.memory_space<vmem>>, vector<30x2xf32>
    tpu.vector_store %arg4[%c0_6, %c0_7], %7 {strides = array<i32>} : memref<30x2xf32, #tpu.memory_space<vmem>>, vector<30x2xf32>,
    return
  }
  func.func @transform_0(%arg0: i32) -> (i32, i32) {
    %c0_i32 = arith.constant 0 : i32
    %c0_i32_0 = arith.constant 0 : i32
    return %c0_i32, %arg0 : i32, i32
  }
  func.func @transform_1(%arg0: i32) -> (i32, i32) {
    %c0_i32 = arith.constant 0 : i32
    %c0_i32_0 = arith.constant 0 : i32
    %c0_i32_1 = arith.constant 0 : i32
    return %c0_i32, %c0_i32_0 : i32, i32
  }
  func.func @transform_2(%arg0: i32) -> (i32, i32) {
    %c0_i32 = arith.constant 0 : i32
    %c0_i32_0 = arith.constant 0 : i32
    %c0_i32_1 = arith.constant 0 : i32
    return %c0_i32, %c0_i32_0 : i32, i32
  }
  func.func @transform_3(%arg0: i32) -> (i32, i32) {
    %c0_i32 = arith.constant 0 : i32
    %c0_i32_0 = arith.constant 0 : i32
    return %c0_i32, %arg0 : i32, i32
  }
}

</mosaic_0001>

<llo_original>
// kernel: tpu_custom_call.1
$region0: #{tpu_custom_call.1}
  #allocation0 [shape = 'u32[]', space=smem, size = 0x4, offset = 0x4, fixed_abs, tag = 'smem constant byte address 0x4 - core index']
  #allocation1 [shape = 'u32[144,128]{1,0:T(1,128)}', space=vmem, size = 0x12000, scoped, tag = 'internal scratch']
  %s0 = inlined_call_operand.vmem [shape: f32[40,2], index: 0, kind: input, shape index: {}]
  %s1 = inlined_call_operand.vmem [shape: f32[30,40], index: 1, kind: input, shape index: {}]
  %s2 = inlined_call_operand.vmem [shape: f32[30,1], index: 2, kind: input, shape index: {}]
  %s3 = inlined_call_operand.vmem [shape: f32[30,2], index: 3, kind: output, shape index: {}]
  %s4 = sld [smem:[#allocation0]]
  $region22: #{tpu_custom_call.1} parent=0
    _
  %s6 = ssub.s32 1, %s4
  %s7 = scalar_select 0, %s6, %s4
  // Predicated region
  $region2: #{tpu_custom_call.1} parent=0 // pred_check
    _
  $region3: #{tpu_custom_call.1} parent=0 // pred_check_branch
    %9 = sbr.rel (0) target = $region5
  $region4: #{tpu_custom_call.1} parent=0 // pred_region
    _
  $region5: #{tpu_custom_call.1} parent=0 // pred_fallthru
    _
  // Predicated region
  $region6: #{tpu_custom_call.1} parent=0 // pred_check
    _
  $region7: #{tpu_custom_call.1} parent=0 // pred_check_branch
    %11 = sbr.rel (0) target = $region9
  $region8: #{tpu_custom_call.1} parent=0 // pred_region
    _
  $region9: #{tpu_custom_call.1} parent=0 // pred_fallthru
    _
  // Predicated region
  $region10: #{tpu_custom_call.1} parent=0 // pred_check
    _
  $region11: #{tpu_custom_call.1} parent=0 // pred_check_branch
    %13 = sbr.rel (0) target = $region13
  $region12: #{tpu_custom_call.1} parent=0 // pred_region
    _
  $region13: #{tpu_custom_call.1} parent=0 // pred_fallthru
    _
  %v14 = vld [vmem:[%s1] sm:$0xff]
  %v15 = vld [vmem:[%s1 + $0x8] sm:$0xff]
  %v16 = vld [vmem:[%s1 + $0x10] sm:$0xff]
  %v17 = vld [vmem:[%s1 + $0x18] sm:$0x3f]
  %v18 = vld [vmem:[%s0] sm:$0xff]
  %v19 = vld [vmem:[%s0 + $0x8] sm:$0xff]
  %v20 = vld [vmem:[%s0 + $0x10] sm:$0xff]
  %v21 = vld [vmem:[%s0 + $0x18] sm:$0xff]
  %v22 = vld [vmem:[%s0 + $0x20] sm:$0xff]
  %v23 = vld [vmem:[%s2] sm:$0xff]
  %v24 = vld [vmem:[%s2 + $0x8] sm:$0xff]
  %v25 = vld [vmem:[%s2 + $0x10] sm:$0xff]
  %v26 = vld [vmem:[%s2 + $0x18] sm:$0x3f]
  %28 = vset.pattern.permute.xlu0 0
  %29 = vperm.xlu0 %28, %v23
  %v30 = vpop.permute.xlu0 %29
  %33 = vset.pattern.permute.xlu0 0
  %34 = vperm.xlu0 %33, %v24
  %v35 = vpop.permute.xlu0 %34
  %38 = vset.pattern.permute.xlu0 0
  %39 = vperm.xlu0 %38, %v25
  %v40 = vpop.permute.xlu0 %39
  %43 = vset.pattern.permute.xlu0 0
  %44 = vperm.xlu0 %43, %v26
  %v45 = vpop.permute.xlu0 %44
  %vm47 = vcmask 326656
  %v49 = vsel %vm47, %v14, 0
  %v52 = vsel %vm47, %v15, 0
  %v55 = vsel %vm47, %v16, 0
  %v58 = vsel %vm47, %v17, 0
  %60 = vmatprep.subr.mxu0 0.0
  %61 = vmatpush1.msra.mxu0 0.0
  %62 = vmatprep.subr.mxu0 0.0
  %63 = vmatpush1.msra.mxu0 0.0
  %64 = vmatprep.subr.mxu0 0.0
  %65 = vmatpush1.msra.mxu0 0.0
  %66 = vmatprep.subr.mxu0 0.0
  %67 = vmatpush1.msra.mxu0 0.0
  %68 = vmatprep.subr.mxu0 0.0
  %69 = vmatpush1.msra.mxu0 0.0
  %70 = vmatprep.subr.mxu0 0.0
  %71 = vmatpush1.msra.mxu0 0.0
  %72 = vmatprep.subr.mxu0 0.0
  %73 = vmatpush1.msra.mxu0 0.0
  %74 = vmatprep.subr.mxu0 0.0
  %75 = vmatpush1.msra.mxu0 0.0
  %76 = vmatprep.subr.mxu0 0.0
  %77 = vmatpush1.msra.mxu0 0.0
  %78 = vmatprep.subr.mxu0 0.0
  %79 = vmatpush1.msra.mxu0 0.0
  %80 = vmatprep.subr.mxu0 0.0
  %81 = vmatpush1.msra.mxu0 0.0
  %82 = vmatprep.subr.mxu0 0.0
  %83 = vmatpush1.msra.mxu0 %v22
  %84 = vmatprep.subr.mxu0 0.0
  %85 = vmatpush1.msra.mxu0 %v21
  %86 = vmatprep.subr.mxu0 0.0
  %87 = vmatpush1.msra.mxu0 %v20
  %88 = vmatprep.subr.mxu0 0.0
  %89 = vmatpush1.msra.mxu0 %v19
  %90 = vmatprep.subr.mxu0 0.0
  %91 = vmatpush1.msra.mxu0 %v18
  %92 = vmatprep.subr.mxu0 0.0
  %93 = vmatpush2.msra.mxu0 0.0
  %94 = vmatprep.subr.mxu0 0.0
  %95 = vmatpush2.msra.mxu0 0.0
  %96 = vmatprep.subr.mxu0 0.0
  %97 = vmatpush2.msra.mxu0 0.0
  %98 = vmatprep.subr.mxu0 0.0
  %99 = vmatpush2.msra.mxu0 0.0
  %100 = vmatprep.subr.mxu0 0.0
  %101 = vmatpush2.msra.mxu0 0.0
  %102 = vmatprep.subr.mxu0 0.0
  %103 = vmatpush2.msra.mxu0 0.0
  %104 = vmatprep.subr.mxu0 0.0
  %105 = vmatpush2.msra.mxu0 0.0
  %106 = vmatprep.subr.mxu0 0.0
  %107 = vmatpush2.msra.mxu0 0.0
  %108 = vmatprep.subr.mxu0 0.0
  %109 = vmatpush2.msra.mxu0 0.0
  %110 = vmatprep.subr.mxu0 0.0
  %111 = vmatpush2.msra.mxu0 0.0
  %112 = vmatprep.subr.mxu0 0.0
  %113 = vmatpush2.msra.mxu0 0.0
  %114 = vmatprep.subr.mxu0 0.0
  %115 = vmatpush2.msra.mxu0 0.0
  %116 = vmatprep.subr.mxu0 0.0
  %117 = vmatpush2.msra.mxu0 0.0
  %118 = vmatprep.subr.mxu0 0.0
  %119 = vmatpush2.msra.mxu0 0.0
  %120 = vmatprep.subr.mxu0 0.0
  %121 = vmatpush2.msra.mxu0 0.0
  %122 = vmatprep.subr.mxu0 0.0
  %123 = vmatpush2.msra.mxu0 0.0
  %124 = vmatprep.mubr.f32.mxu0 0.0
  %125 = vmatmul.mubr.f32.gmra.mxu0 %v49
  %v126 = vpop.f32.mrf.mxu0
  %v127 = vadd.f32 %v30, %v126
  %v128 = vpop.f32.mrf.mxu0
  %129 = vmatprep.mubr.f32.mxu0 0.0
  %130 = vmatmul.mubr.f32.gmra.mxu0 %v52
  %v131 = vpop.f32.mrf.mxu0
  %v132 = vadd.f32 %v35, %v131
  %v133 = vpop.f32.mrf.mxu0
  %134 = vmatprep.mubr.f32.mxu0 0.0
  %135 = vmatmul.mubr.f32.gmra.mxu0 %v55
  %v136 = vpop.f32.mrf.mxu0
  %v137 = vadd.f32 %v40, %v136
  %v138 = vpop.f32.mrf.mxu0
  %139 = vmatprep.mubr.f32.mxu0 0.0
  %140 = vmatmul.mubr.f32.gmra.mxu0 %v58
  %v141 = vpop.f32.mrf.mxu0
  %v142 = vadd.f32 %v45, %v141
  %v143 = vpop.f32.mrf.mxu0
  %144 = vdwg.mxu0
  %v145 = vmax.f32 %v127, 0.0
  %v146 = vmax.f32 %v132, 0.0
  %v147 = vmax.f32 %v137, 0.0
  %v148 = vmax.f32 %v142, 0.0
  %vm149 = vcmask 15360
  %150 = vst.msk [vmem:[%s3] sm:$0xff] %vm149, %v145
  %151 = vst.msk [vmem:[%s3 + $0x8] sm:$0xff] %vm149, %v146
  %152 = vst.msk [vmem:[%s3 + $0x10] sm:$0xff] %vm149, %v147
  %vm153 = vcmask 13312
  %154 = vst.msk [vmem:[%s3 + $0x18] sm:$0x3f] %vm153, %v148
  // Predicated region
  $region14: #{tpu_custom_call.1} parent=0 // pred_check
    _
  $region15: #{tpu_custom_call.1} parent=0 // pred_check_branch
    %156 = sbr.rel (0) target = $region17
  $region16: #{tpu_custom_call.1} parent=0 // pred_region
    _
  $region17: #{tpu_custom_call.1} parent=0 // pred_fallthru
    _
  // Predicated region
  $region18: #{tpu_custom_call.1} parent=0 // pred_check
    _
  $region19: #{tpu_custom_call.1} parent=0 // pred_check_branch
    %158 = sbr.rel (0) target = $region21
  $region20: #{tpu_custom_call.1} parent=0 // pred_region
    _
  $region21: #{tpu_custom_call.1} parent=0 // pred_fallthru
    _

</llo_original>
